<compile_context>
chip_gen: v6e
topology: v6e:2x2x1
jax: 0.10.0
libtpu: 0.0.40
codegen_flags: <defaults>
</compile_context>

<pallas_src>
import jax
import jax.numpy as jnp
from jax.experimental import pallas as pl
from jax.experimental.pallas import tpu as pltpu


LANE = 512                          # lane-dense slab width (multiple of 128)
MAX_TILE_BYTES = 4 * 1024 * 1024    # per-buffer block budget (4 MiB)
TARGET_GRID_STEPS = 8               # aim for >= 8 steps so v7x megacore splits work
SMALL_INPUT_ELEMS = 64 * 1024       # below this, a kernel launch isn't worth it


def _affine_kernel(w_ref, b_ref, x_ref, o_ref):
    # w_ref/b_ref: f32 scalars in SMEM (shape (1,)); x_ref/o_ref: (tr, LANE) VMEM tiles.
    w = w_ref[0]
    b = b_ref[0]
    o_ref[...] = (x_ref[...].astype(jnp.float32) * w + b).astype(o_ref.dtype)


def _round_up(a, m):
    return (a + m - 1) // m * m


def linear_regression_forward(x, weight, bias, *, force_pallas=False):
    """y = x @ weight.T + bias  for weight [1,1], bias [1], x [..., 1]."""
    orig_shape = x.shape
    flat = x.reshape(-1)                        # contiguous reshape: free
    n = flat.shape[0]
    itemsize = jnp.dtype(x.dtype).itemsize

    w_f32 = weight.reshape(()).astype(jnp.float32)
    b_f32 = bias.reshape(()).astype(jnp.float32)

    # Small-input fast path: launch/pad overhead dominates; let XLA fuse it.
    if n < SMALL_INPUT_ELEMS and not force_pallas:
        y = (flat.astype(jnp.float32) * w_f32 + b_f32).astype(x.dtype)
        return y.reshape(orig_shape)

    # ---- lane-dense slab view (pad only the sub-LANE tail, if any) ----------
    n_pad = _round_up(n, LANE)
    if n_pad != n:
        flat_in = jnp.pad(flat, (0, n_pad - n))     # tail pad (< LANE elems)
    else:
        flat_in = flat                              # no copy at all
    rows = n_pad // LANE
    x_slab = flat_in.reshape(rows, LANE)            # contiguous reshape: free

    # ---- tile-size selection -------------------------------------------------
    # Sublane packing: f32 -> 8 rows, bf16/f16 -> 16, int8/fp8 -> 32.
    packing = 8 * max(1, 4 // itemsize)
    max_tile_rows = max(packing, MAX_TILE_BYTES // (LANE * itemsize))
    if rows <= packing:
        tr = rows                                   # full-dim block (exempt from 8-row rule)
    else:
        tr = _round_up(pl.cdiv(rows, TARGET_GRID_STEPS), packing)
        tr = min(tr, max_tile_rows, _round_up(rows, packing))
    grid = (pl.cdiv(rows, tr),)                     # partial last block handled by Pallas

    w_s = w_f32.reshape(1)
    b_s = b_f32.reshape(1)

    out = pl.pallas_call(
        _affine_kernel,
        out_shape=jax.ShapeDtypeStruct((rows, LANE), x.dtype),
        grid=grid,
        in_specs=[
            pl.BlockSpec(memory_space=pltpu.SMEM),          # weight scalar
            pl.BlockSpec(memory_space=pltpu.SMEM),          # bias scalar
            pl.BlockSpec((tr, LANE), lambda i: (i, 0)),     # x tile
        ],
        out_specs=pl.BlockSpec((tr, LANE), lambda i: (i, 0)),
        compiler_params=pltpu.CompilerParams(
            dimension_semantics=("parallel",),
            vmem_limit_bytes=32 * 1024 * 1024,
        ),
        cost_estimate=pl.CostEstimate(
            flops=2 * n,
            transcendentals=0,
            bytes_accessed=2 * n * itemsize,
        ),
    )(w_s, b_s, x_slab)

    y_flat = out.reshape(-1)                        # free
    if n_pad != n:
        y_flat = y_flat[:n]                         # only when we had to pad
    return y_flat.reshape(orig_shape)


if __name__ == "__main__":
    key = jax.random.PRNGKey(0)
    k_x, k_x2, k_x3, k_x4, k_w, k_b = jax.random.split(key, 6)

    # Deterministic "parameters" for nn.Linear(1, 1, bias=True)
    weight = jax.random.uniform(k_w, (1, 1), jnp.float32, -1.0, 1.0)  # [out, in]
    bias = jax.random.uniform(k_b, (1,), jnp.float32, -1.0, 1.0)      # [out]

    def ref(v):
        return v @ weight.T + bias

    # 1) Tiny batch -> small-input fast path (plain XLA).
    x = jax.random.normal(k_x, (8, 1), jnp.float32)
    y = linear_regression_forward(x, weight, bias)
    jax.block_until_ready(y)
    assert y.shape == ref(x).shape and jnp.allclose(y, ref(x), atol=1e-6), "fast path mismatch"

    # 2) Ragged batch -> Pallas path with sub-LANE tail pad + tail slice.
    x2 = jax.random.normal(k_x2, (3000, 1), jnp.float32)
    y2 = linear_regression_forward(x2, weight, bias, force_pallas=True)
    jax.block_until_ready(y2)
    assert y2.shape == ref(x2).shape and jnp.allclose(y2, ref(x2), atol=1e-6), "ragged mismatch"

    # 3) rows not a multiple of the tile -> exercises the partial last block.
    x3 = jax.random.normal(k_x3, (9 * LANE, 1), jnp.float32)
    y3 = linear_regression_forward(x3, weight, bias, force_pallas=True)
    jax.block_until_ready(y3)
    assert y3.shape == ref(x3).shape and jnp.allclose(y3, ref(x3), atol=1e-6), "partial-block mismatch"

    # 4) Exact multiple of LANE -> zero-copy path (no pad, no slice).
    x4 = jax.random.normal(k_x4, (8 * LANE, 1), jnp.float32)
    y4 = linear_regression_forward(x4, weight, bias, force_pallas=True)
    jax.block_until_ready(y4)
    assert y4.shape == ref(x4).shape and jnp.allclose(y4, ref(x4), atol=1e-6), "no-pad mismatch"

    print("KERNEL_OK")
</pallas_src>

<mosaic_0001>
module attributes {stable_mosaic.version = 11 : i64} {
  func.func @_affine_kernel(%arg0: i32, %arg1: memref<1xf32, #tpu.memory_space<smem>>, %arg2: memref<1xf32, #tpu.memory_space<smem>>, %arg3: memref<6x512xf32, #tpu.memory_space<vmem>>, %arg4: memref<6x512xf32, #tpu.memory_space<vmem>>) attributes {dimension_semantics = [#tpu.dimension_semantics<parallel>], iteration_bounds = array<i64: 1>, scalar_prefetch = 0 : i64, scratch_operands = 0 : i64, tpu.core_type = #tpu.core_type<tc>, window_params = [{transform_indices = @transform_0, window_bounds = array<i64: 1>}, {transform_indices = @transform_1, window_bounds = array<i64: 1>}, {transform_indices = @transform_2, window_bounds = array<i64: 6, 512>}, {transform_indices = @transform_3, window_bounds = array<i64: 6, 512>}]} {
    %c0 = arith.constant 0 : index
    %0 = memref.load %arg1[%c0] : memref<1xf32, #tpu.memory_space<smem>>
    %c0_0 = arith.constant 0 : index
    %1 = memref.load %arg2[%c0_0] : memref<1xf32, #tpu.memory_space<smem>>
    %c0_1 = arith.constant 0 : index
    %c0_2 = arith.constant 0 : index
    %2 = vector.load %arg3[%c0_1, %c0_2] : memref<6x512xf32, #tpu.memory_space<vmem>>, vector<6x512xf32>
    %3 = vector.broadcast %0 : f32 to vector<6x512xf32>
    %4 = arith.mulf %2, %3 : vector<6x512xf32>
    %5 = vector.broadcast %1 : f32 to vector<6x512xf32>
    %6 = arith.addf %4, %5 : vector<6x512xf32>
    %c0_3 = arith.constant 0 : index
    %c0_4 = arith.constant 0 : index
    %7 = vector.load %arg4[%c0_3, %c0_4] : memref<6x512xf32, #tpu.memory_space<vmem>>, vector<6x512xf32>
    tpu.vector_store %arg4[%c0_3, %c0_4], %6 {strides = array<i32>} : memref<6x512xf32, #tpu.memory_space<vmem>>, vector<6x512xf32>,
    return
  }
  func.func @transform_0(%arg0: i32) -> i32 {
    %c0_i32 = arith.constant 0 : i32
    %c0_i32_0 = arith.constant 0 : i32
    return %c0_i32 : i32
  }
  func.func @transform_1(%arg0: i32) -> i32 {
    %c0_i32 = arith.constant 0 : i32
    %c0_i32_0 = arith.constant 0 : i32
    return %c0_i32 : i32
  }
  func.func @transform_2(%arg0: i32) -> (i32, i32) {
    %c0_i32 = arith.constant 0 : i32
    %c0_i32_0 = arith.constant 0 : i32
    return %arg0, %c0_i32 : i32, i32
  }
  func.func @transform_3(%arg0: i32) -> (i32, i32) {
    %c0_i32 = arith.constant 0 : i32
    %c0_i32_0 = arith.constant 0 : i32
    return %arg0, %c0_i32 : i32, i32
  }
}

</mosaic_0001>

<llo_original>
// kernel: tpu_custom_call.1
$region0: #{tpu_custom_call.1}
  #allocation0 [shape = 'u32[]', space=smem, size = 0x4, offset = 0x4, fixed_abs, tag = 'smem constant byte address 0x4 - core index']
  #allocation1 [shape = 'u32[144,128]{1,0:T(1,128)}', space=vmem, size = 0x12000, scoped, tag = 'internal scratch']
  #allocation2 [shape = 'f32[1]{0:T(128)S(6)}', space=smem, size = 0x200, scoped, tag = 'scoped memory for tpu_custom_call.1']
  #allocation3 [shape = 'f32[1]{0:T(128)S(6)}', space=smem, size = 0x200, scoped, tag = 'scoped memory for tpu_custom_call.1']
  %s0 = inlined_call_operand.<no memory space> [shape: f32[1], index: 0, kind: input, shape index: {}]
  %s1 = inlined_call_operand.<no memory space> [shape: f32[1], index: 1, kind: input, shape index: {}]
  %s2 = inlined_call_operand.hbm [shape: f32[6,512], index: 2, kind: input, shape index: {}]
  %s3 = inlined_call_operand.hbm [shape: f32[6,512], index: 3, kind: output, shape index: {}]
  %s4 = sld [smem:[#allocation0]]
  $region26: #{tpu_custom_call.1} parent=0
    _
  %s6 = ssub.s32 1, %s4
  %s7 = scalar_select 0, %s6, %s4
  %8 = sst [smem:[#allocation2]] %s0
  %9 = sst [smem:[#allocation3]] %s1
  $region1: #{tpu_custom_call.1} parent=0
    #allocation4 [shape = 'u8[16384]{0}', space=vmem, size = 0x4000, scoped, tag = 'input window, operand 2, single buffered']
    #allocation5 [shape = 's32[1]{0}', space=sflag, size = 0x4, scoped, tag = 'scoped memory for tpu_custom_call.1']
    #allocation6 [shape = 's32[1]{0}', space=sflag, size = 0x4, scoped, tag = 'scoped memory for tpu_custom_call.1']
    #allocation7 [shape = 'u8[16384]{0}', space=vmem, size = 0x4000, scoped, tag = 'output window, operand 0, single buffered']
    %10 = vsyncpa [#allocation5], 0
    %11 = vsyncpa [#allocation6], 0
    // Predicated region
    $region2: #{tpu_custom_call.1} parent=1 // pred_check
      _
    $region3: #{tpu_custom_call.1} parent=1 // pred_check_branch
      %13 = sbr.rel (0) target = $region5
    $region4: #{tpu_custom_call.1} parent=1 // pred_region
      _
    $region5: #{tpu_custom_call.1} parent=1 // pred_fallthru
      _
    // Predicated region
    $region6: #{tpu_custom_call.1} parent=1 // pred_check
      _
    $region7: #{tpu_custom_call.1} parent=1 // pred_check_branch
      %15 = sbr.rel (0) target = $region9
    $region8: #{tpu_custom_call.1} parent=1 // pred_region
      _
    $region9: #{tpu_custom_call.1} parent=1 // pred_fallthru
      _
    // Predicated region
    $region10: #{tpu_custom_call.1} parent=1 // pred_check
      _
    $region11: #{tpu_custom_call.1} parent=1 // pred_check_branch
      %17 = sbr.rel (0) target = $region13
    $region12: #{tpu_custom_call.1} parent=1 // pred_region
      %s19 = ssub.s32 512, 512
      %20 = vsyncadd [#allocation5], %s19
      %s22 = sshll.u32 [#allocation4], 4
      %s23 = int_to_ptr.vmem [resolvable:$true] %s22
      %25 = dma.hbm_to_vmem [thread:$0]  %s2, 512, %s23, [#allocation5]
    $region13: #{tpu_custom_call.1} parent=1 // pred_fallthru
      _
    // Predicated region
    $region14: #{tpu_custom_call.1} parent=1 // pred_check
      _
    $region15: #{tpu_custom_call.1} parent=1 // pred_check_branch
      %27 = sbr.rel (0) target = $region17
    $region16: #{tpu_custom_call.1} parent=1 // pred_region
      %28 = dma.done [#allocation5], 512
    $region17: #{tpu_custom_call.1} parent=1 // pred_fallthru
      _
    %s29 = sld [smem:[#allocation2]]
    %s30 = sld [smem:[#allocation3]]
    %v31 = vld [vmem:[#allocation4] sm:$0x3f]
    %v32 = vld [vmem:[#allocation4 + $0x8] sm:$0x3f]
    %v33 = vld [vmem:[#allocation4 + $0x10] sm:$0x3f]
    %v34 = vld [vmem:[#allocation4 + $0x18] sm:$0x3f]
    %v35 = vstv %s29
    %v36 = vmul.f32 %v31, %v35
    %v37 = vmul.f32 %v32, %v35
    %v38 = vmul.f32 %v33, %v35
    %v39 = vmul.f32 %v34, %v35
    %v40 = vstv %s30
    %v41 = vadd.f32 %v36, %v40
    %v42 = vadd.f32 %v37, %v40
    %v43 = vadd.f32 %v38, %v40
    %v44 = vadd.f32 %v39, %v40
    %45 = vst [vmem:[#allocation7] sm:$0x3f] %v41
    %46 = vst [vmem:[#allocation7 + $0x8] sm:$0x3f] %v42
    %47 = vst [vmem:[#allocation7 + $0x10] sm:$0x3f] %v43
    %48 = vst [vmem:[#allocation7 + $0x18] sm:$0x3f] %v44
    // Predicated region
    $region18: #{tpu_custom_call.1} parent=1 // pred_check
      _
    $region19: #{tpu_custom_call.1} parent=1 // pred_check_branch
      %50 = sbr.rel (0) target = $region21
    $region20: #{tpu_custom_call.1} parent=1 // pred_region
      %s52 = ssub.s32 512, 512
      %53 = vsyncadd [#allocation6], %s52
      %s55 = sshll.u32 [#allocation7], 4
      %s56 = int_to_ptr.vmem [resolvable:$true] %s55
      %58 = dma.vmem_to_hbm [thread:$0]  %s56, 512, %s3, [#allocation6]
    $region21: #{tpu_custom_call.1} parent=1 // pred_fallthru
      _
    // Predicated region
    $region22: #{tpu_custom_call.1} parent=1 // pred_check
      _
    $region23: #{tpu_custom_call.1} parent=1 // pred_check_branch
      %60 = sbr.rel (0) target = $region25
    $region24: #{tpu_custom_call.1} parent=1 // pred_region
      %61 = dma.done [#allocation6], 512
    $region25: #{tpu_custom_call.1} parent=1 // pred_fallthru
      _
    %62 = vsyncpa [#allocation5], 1
    %63 = vsyncpa [#allocation6], 1

</llo_original>
